<compile_context>
chip_gen: v5e
topology: v5e:2x2
jax: 0.10.0
libtpu: 0.0.40
codegen_flags: <defaults>
</compile_context>

<pallas_src>
import jax
import jax.numpy as jnp
from jax.experimental import pallas as pl
from jax.experimental.pallas import tpu as pltpu


NEG_INF = -1e30               # mask sentinel: survives bf16, underflows in exp
FLASH_SRC_THRESHOLD = 16384   # tile the src axis (online softmax) beyond this
EDGE_STREAM_BUFFERS = 2       # sweep to 3 on v7x if the edge-stream DMA is exposed


# --------------------------------------------------------------------- helpers
def _round_up(x, m):
    return (x + m - 1) // m * m


def _vmem_capacity_bytes():
    try:
        info = pltpu.get_tpu_info()
        for name in ("vmem_capacity_bytes", "vmem_size_bytes", "vmem_bytes"):
            v = getattr(info, name, None)
            if v:
                return int(v)
    except Exception:
        pass
    # Fallback keyed off the device kind: v7x has 64 MiB per TC, v4/v5e/v6e 128 MiB.
    try:
        kind = jax.devices()[0].device_kind.lower()
    except Exception:
        kind = ""
    return (64 if "v7" in kind else 128) * 1024 * 1024


def _spec(block_shape, index_map, buffers=None):
    """BlockSpec with an optional buffer-count hint; degrades gracefully."""
    if buffers is not None and buffers != 2 and hasattr(pl, "Buffered"):
        try:
            return pl.BlockSpec(block_shape, index_map,
                                pipeline_mode=pl.Buffered(buffers))
        except TypeError:
            pass
    return pl.BlockSpec(block_shape, index_map)


def _pick_tiles(np_, dp, vmem_cap, force_src_tile=None):
    """Pick (tm, tk). tk == np_ -> single-pass softmax with resident bf16 z."""
    budget = int(vmem_cap * 0.65)

    # ---- source-axis tile -------------------------------------------------
    if force_src_tile is not None:
        tk = max(128, min(_round_up(force_src_tile, 128), np_))
        while np_ % tk:          # np_ is a multiple of 128 -> terminates at 128
            tk -= 128
    elif np_ <= FLASH_SRC_THRESHOLD and 2 * np_ * dp <= budget // 2:
        tk = np_                 # z (bf16, single buffered) stays resident
    else:
        tk = 2048
        while np_ % tk:
            tk //= 2
    single_pass = tk == np_

    # ---- VMEM accounting (bytes) -------------------------------------------
    if single_pass:
        # residents (single-buffered via Buffered(1)): z bf16 + s_src f32
        resident = 2 * np_ * dp + 4 * np_
        # per dst row: bf16 e_pre stream + ~5 f32 temps + bf16 alpha + z_i/out f32 x2
        per_row = (2 * EDGE_STREAM_BUFFERS + 22) * np_ + 16 * dp
    else:
        # per-step streams independent of tm: z bf16 + s_src f32 (double buffered)
        resident = 4 * tk * dp + 8 * tk
        # per dst row: e_pre stream + f32 temps over (tm, tk) + z_i/out/acc f32
        per_row = (2 * EDGE_STREAM_BUFFERS + 22) * tk + 20 * dp + 16

    tm = max(32, min(512, (budget - resident) // max(per_row, 1), np_))
    tm = 1 << (tm.bit_length() - 1)          # round down to a power of two
    tm = max(32, min(tm, np_))
    while np_ % tm:                          # np_ is a multiple of 128
        tm //= 2
    # keep the dst grid length even: v7x shards the "parallel" axis over 2 TCs
    if (np_ // tm) % 2 and np_ // tm > 1 and tm >= 64:
        tm //= 2
    return tm, tk


# --------------------------------------------------------------------- kernels
def _make_gat_kernel(sd_col):
    """Single-pass attention kernel: full src axis resident in the block."""

    def kernel(s_src_ref, e_ref, z_ref, zi_ref, out_ref):
        # logits[dst, src] = s_dst + s_src + (adj ? c*d : -1e30)   (f32 math)
        logits = s_src_ref[...] + e_ref[...].astype(jnp.float32)
        if sd_col is not None:
            logits = logits + zi_ref[:, sd_col:sd_col + 1]       # stashed s_dst
        e = jnp.maximum(logits, 0.01 * logits)                   # leaky_relu, 1 pass
        m = jnp.max(e, axis=-1, keepdims=True)                   # XLU reduce
        p = jnp.exp(e - m)                                       # EUP
        denom = jnp.sum(p, axis=-1, keepdims=True)
        alpha = (p * pl.reciprocal(denom, approx=True)).astype(jnp.bfloat16)
        # neighbourhood aggregation: bf16 MXU matmul, f32 accumulate
        z_nb = jnp.dot(alpha, z_ref[...], preferred_element_type=jnp.float32)
        out_ref[...] = jnp.maximum(zi_ref[...] + z_nb, 0.0)      # fcU skip + relu

    return kernel


def _make_gat_flash_kernel(sd_col):
    """Src-tiled attention: flash-style online masked softmax over source tiles."""

    def kernel(s_src_ref, e_ref, z_ref, zi_ref, out_ref, m_sc, l_sc, acc_sc):
        k = pl.program_id(1)

        @pl.when(k == 0)
        def _():
            m_sc[...] = jnp.full_like(m_sc, -jnp.inf)
            l_sc[...] = jnp.zeros_like(l_sc)
            acc_sc[...] = jnp.zeros_like(acc_sc)

        logits = s_src_ref[...] + e_ref[...].astype(jnp.float32)
        if sd_col is not None:
            logits = logits + zi_ref[:, sd_col:sd_col + 1]
        e = jnp.maximum(logits, 0.01 * logits)

        m_new = jnp.maximum(m_sc[...], jnp.max(e, axis=-1, keepdims=True))
        a = jnp.exp(m_sc[...] - m_new)
        p = jnp.exp(e - m_new)
        l_sc[...] = a * l_sc[...] + jnp.sum(p, axis=-1, keepdims=True)
        acc_sc[...] = a * acc_sc[...] + jnp.dot(
            p.astype(jnp.bfloat16), z_ref[...], preferred_element_type=jnp.float32)
        m_sc[...] = m_new

        @pl.when(k == pl.num_programs(1) - 1)
        def _():
            z_nb = acc_sc[...] * pl.reciprocal(l_sc[...], approx=True)
            out_ref[...] = jnp.maximum(zi_ref[...] + z_nb, 0.0)

    return kernel


# --------------------------------------------------------------------- layer
def gat_layer(h, d, adj, params, force_src_tile=None):
    N = h.shape[0]
    dout = params["wW"].shape[0]
    wa = params["wA"]

    # ---- projections + per-node scores: hoisted, done once in XLA ----------
    z = (h @ params["wW"].T).astype(jnp.float32)             # fcW    (N, Dout)
    z_i = (h @ params["wU"].T).astype(jnp.float32)           # fcU    (N, Dout)
    a_sd = jnp.stack([wa[0, :dout], wa[0, dout:2 * dout]], axis=1)   # (Dout, 2)
    s = z @ a_sd                                              # merged score matmul
    s_src, s_dst = s[:, 0], s[:, 1]
    c = (params["wV"][0, 0] * wa[0, 2 * dout]).astype(jnp.float32)   # fcV * a_t

    # ---- pad to TPU-friendly shapes -----------------------------------------
    np_ = _round_up(N, 128)
    dp = _round_up(dout, 128)
    sd_col = dout if dout < dp else None      # spare z_i column to stash s_dst

    # single precomputed bf16 edge stream: adjacency mask + scalar c folded in
    e_vals = c * d
    if sd_col is None:
        e_vals = e_vals + s_dst[:, None]      # no spare column -> fold s_dst too
    e_core = jnp.where(adj > 0, e_vals, NEG_INF)
    e_pre = (jnp.full((np_, np_), NEG_INF, jnp.float32)
             .at[:N, :N].set(e_core).astype(jnp.bfloat16))

    z_p = jnp.zeros((np_, dp), jnp.bfloat16).at[:N, :dout].set(z.astype(jnp.bfloat16))
    zi_p = jnp.zeros((np_, dp), jnp.float32).at[:N, :dout].set(z_i)
    if sd_col is not None:
        zi_p = zi_p.at[:N, sd_col].set(s_dst)
    ssrc_p = jnp.zeros((1, np_), jnp.float32).at[0, :N].set(s_src)

    vmem_cap = _vmem_capacity_bytes()
    tm, tk = _pick_tiles(np_, dp, vmem_cap, force_src_tile)

    cost = pl.CostEstimate(
        flops=2 * np_ * np_ * dp + 10 * np_ * np_,
        transcendentals=np_ * np_ + np_,
        bytes_accessed=np_ * np_ * 2 + np_ * dp * (2 + 4 + 4) + np_ * 4,
    )
    vmem_limit = int(min(vmem_cap * 0.8, 120 * 1024 * 1024))

    if tk == np_:
        kernel = _make_gat_kernel(sd_col)
        grid = (np_ // tm,)
        spec_args = [
            ((1, np_), lambda i: (0, 0), 1),                      # s_src (resident)
            ((tm, np_), lambda i: (i, 0), EDGE_STREAM_BUFFERS),   # e_pre bf16 stream
            ((np_, dp), lambda i: (0, 0), 1),                     # z bf16 (resident)
            ((tm, dp), lambda i: (i, 0), None),                   # z_i (+ stashed s_dst)
        ]
        out_spec = pl.BlockSpec((tm, dp), lambda i: (i, 0))
        scratch = []
        dims = ("parallel",)
    else:
        kernel = _make_gat_flash_kernel(sd_col)
        grid = (np_ // tm, np_ // tk)
        spec_args = [
            ((1, tk), lambda i, k: (0, k), None),                 # s_src tile
            ((tm, tk), lambda i, k: (i, k), EDGE_STREAM_BUFFERS),  # e_pre tile
            ((tk, dp), lambda i, k: (k, 0), None),                # z bf16 tile
            ((tm, dp), lambda i, k: (i, 0), None),                # z_i (+ stashed s_dst)
        ]
        out_spec = pl.BlockSpec((tm, dp), lambda i, k: (i, 0))
        scratch = [pltpu.VMEM((tm, 1), jnp.float32),              # running max
                   pltpu.VMEM((tm, 1), jnp.float32),              # running denom
                   pltpu.VMEM((tm, dp), jnp.float32)]             # running accum
        dims = ("parallel", "arbitrary")

    def _call(use_buffer_hints):
        in_specs = [_spec(bs, im, bufs if use_buffer_hints else None)
                    for bs, im, bufs in spec_args]
        out = pl.pallas_call(
            kernel,
            out_shape=jax.ShapeDtypeStruct((np_, dp), jnp.float32),
            grid=grid,
            in_specs=in_specs,
            out_specs=out_spec,
            scratch_shapes=scratch,
            compiler_params=pltpu.CompilerParams(
                dimension_semantics=dims, vmem_limit_bytes=vmem_limit),
            cost_estimate=cost,
        )(ssrc_p, e_pre, z_p, zi_p)
        return jax.block_until_ready(out)

    try:
        out_p = _call(True)
    except Exception:
        # buffer-count hints are advisory: retry with default double buffering
        out_p = _call(False)

    return out_p[:N, :dout]


# --------------------------------------------------------------------- model
def init_gat_params(key, in_dim, h_dim, num_hidden_layers=1):
    shapes = [(in_dim, h_dim)] + [(h_dim, h_dim)] * num_hidden_layers
    params = []
    for i, (din, dout) in enumerate(shapes):
        k = jax.random.fold_in(key, i)
        kv, kw, ku, ka = jax.random.split(k, 4)
        params.append({
            "wV": jax.random.normal(kv, (1, 1), jnp.float32) * 0.5,
            "wW": jax.random.normal(kw, (dout, din), jnp.float32) * 0.2,
            "wU": jax.random.normal(ku, (dout, din), jnp.float32) * 0.2,
            "wA": jax.random.normal(ka, (1, 2 * dout + 1), jnp.float32) * 0.2,
        })
    return params


def gat_forward(attr, blocks, params, force_src_tile=None):
    # blocks: list of (adj, d) dense graphs, one per layer (same length as params)
    h = attr
    for (adj, d), p in zip(blocks, params):
        h = gat_layer(h, d, adj, p, force_src_tile=force_src_tile)
    return h


def gat_layer_ref(h, d, adj, params):
    # pure-JAX reference mirroring the PyTorch/DGL semantics (dense form) and
    # the kernel's numeric contract: bf16 edge stream, bf16 alpha@z aggregation.
    dout = params["wW"].shape[0]
    z = h @ params["wW"].T
    z_i = h @ params["wU"].T
    wa = params["wA"]
    a_src, a_dst, a_t = wa[0, :dout], wa[0, dout:2 * dout], wa[0, 2 * dout]
    c = params["wV"][0, 0] * a_t
    e_pre = jnp.where(adj > 0, c * d, NEG_INF).astype(jnp.bfloat16).astype(jnp.float32)
    logits = (z @ a_dst)[:, None] + (z @ a_src)[None, :] + e_pre
    e = jnp.maximum(logits, 0.01 * logits)                    # leaky_relu
    e = e - jnp.max(e, axis=-1, keepdims=True)
    p = jnp.exp(e)
    alpha = p / jnp.sum(p, axis=-1, keepdims=True)
    z_nb = jnp.dot(alpha.astype(jnp.bfloat16), z.astype(jnp.bfloat16),
                   preferred_element_type=jnp.float32)
    return jnp.maximum(z_i + z_nb, 0.0)


def gat_forward_ref(attr, blocks, params):
    h = attr
    for (adj, d), p in zip(blocks, params):
        h = gat_layer_ref(h, d, adj, p)
    return h


# --------------------------------------------------------------------- main
if __name__ == "__main__":
    key = jax.random.PRNGKey(0)

    def run_case(N, in_dim, h_dim, num_hidden, case_key, force_src_tile=None):
        k_attr, k_adj, k_d, k_param = jax.random.split(case_key, 4)
        attr = jax.random.normal(k_attr, (N, in_dim), jnp.float32)
        # adjacency with self loops so every destination has at least one message
        adj = (jax.random.uniform(k_adj, (N, N)) > 0.5).astype(jnp.float32)
        adj = jnp.maximum(adj, jnp.eye(N, dtype=jnp.float32))
        edge_d = jax.random.normal(k_d, (N, N), jnp.float32)
        params = init_gat_params(k_param, in_dim, h_dim, num_hidden)
        blocks = [(adj, edge_d)] * len(params)

        out = jax.block_until_ready(
            gat_forward(attr, blocks, params, force_src_tile=force_src_tile))
        ref = gat_forward_ref(attr, blocks, params)
        assert out.shape == (N, h_dim)
        err = float(jnp.max(jnp.abs(out - ref)))
        assert jnp.allclose(out, ref, atol=1e-2, rtol=1e-2), (
            f"mismatch N={N} (src_tile={force_src_tile}): max abs diff {err}")

    # small demo matching the module's dims (in_dim=8, h_dim=32, 1 hidden layer)
    run_case(N=16, in_dim=8, h_dim=32, num_hidden=1,
             case_key=jax.random.fold_in(key, 0))
    # padding (N not a multiple of 128) + multi-tile dst grid, single-pass softmax
    run_case(N=272, in_dim=8, h_dim=32, num_hidden=1,
             case_key=jax.random.fold_in(key, 1))
    # force the src-tiled online-softmax path (used for np_ > 16K in production)
    run_case(N=272, in_dim=8, h_dim=32, num_hidden=1,
             case_key=jax.random.fold_in(key, 2), force_src_tile=128)

    print("KERNEL_OK")
</pallas_src>

<mosaic_0001>
module attributes {stable_mosaic.version = 11 : i64} {
  func.func @kernel(%arg0: i32, %arg1: memref<1x128xf32, #tpu.memory_space<vmem>>, %arg2: memref<128x128xbf16, #tpu.memory_space<vmem>>, %arg3: memref<128x128xbf16, #tpu.memory_space<vmem>>, %arg4: memref<128x128xf32, #tpu.memory_space<vmem>>, %arg5: memref<128x128xf32, #tpu.memory_space<vmem>>) attributes {dimension_semantics = [#tpu.dimension_semantics<parallel>], iteration_bounds = array<i64: 1>, scalar_prefetch = 0 : i64, scratch_operands = 0 : i64, tpu.core_type = #tpu.core_type<tc>, window_params = [{pipeline_mode = #tpu.pipeline_mode<synchronous>, transform_indices = @transform_0, window_bounds = array<i64: 1, 128>}, {transform_indices = @transform_1, window_bounds = array<i64: 128, 128>}, {pipeline_mode = #tpu.pipeline_mode<synchronous>, transform_indices = @transform_2, window_bounds = array<i64: 128, 128>}, {transform_indices = @transform_3, window_bounds = array<i64: 128, 128>}, {transform_indices = @transform_4, window_bounds = array<i64: 128, 128>}]} {
    %c0 = arith.constant 0 : index
    %c0_0 = arith.constant 0 : index
    %0 = vector.load %arg1[%c0, %c0_0] : memref<1x128xf32, #tpu.memory_space<vmem>>, vector<1x128xf32>
    %c0_1 = arith.constant 0 : index
    %c0_2 = arith.constant 0 : index
    %1 = vector.load %arg2[%c0_1, %c0_2] : memref<128x128xbf16, #tpu.memory_space<vmem>>, vector<128x128xbf16>
    %2 = arith.extf %1 : vector<128x128xbf16> to vector<128x128xf32>
    %3 = vector.broadcast %0 : vector<1x128xf32> to vector<128x128xf32>
    %4 = arith.addf %3, %2 : vector<128x128xf32>
    %c0_3 = arith.constant 0 : index
    %c32 = arith.constant 32 : index
    %5 = vector.load %arg4[%c0_3, %c32] : memref<128x128xf32, #tpu.memory_space<vmem>>, vector<128x1xf32>
    %6 = vector.broadcast %5 : vector<128x1xf32> to vector<128x128xf32>
    %7 = arith.addf %4, %6 : vector<128x128xf32>
    %cst = arith.constant 0.00999999977 : f32
    %8 = vector.broadcast %cst : f32 to vector<128x128xf32>
    %9 = arith.mulf %8, %7 : vector<128x128xf32>
    %10 = arith.maximumf %7, %9 : vector<128x128xf32>
    %cst_4 = arith.constant dense<0xFF800000> : vector<128xf32>
    %11 = vector.multi_reduction <maximumf>, %10, %cst_4 [1] : vector<128x128xf32> to vector<128xf32>
    %12 = vector.shape_cast %11 : vector<128xf32> to vector<128x1xf32>
    %13 = vector.broadcast %12 : vector<128x1xf32> to vector<128x128xf32>
    %14 = arith.subf %10, %13 : vector<128x128xf32>
    %15 = math.exp %14 : vector<128x128xf32>
    %cst_5 = arith.constant dense<0.000000e+00> : vector<128xf32>
    %16 = vector.multi_reduction <add>, %15, %cst_5 [1] : vector<128x128xf32> to vector<128xf32>
    %17 = vector.shape_cast %16 : vector<128xf32> to vector<128x1xf32>
    %18 = tpu.reciprocal %17 {approx = true} : vector<128x1xf32> -> vector<128x1xf32>
    %19 = vector.broadcast %18 : vector<128x1xf32> to vector<128x128xf32>
    %20 = arith.mulf %15, %19 : vector<128x128xf32>
    %21 = arith.truncf %20 : vector<128x128xf32> to vector<128x128xbf16>
    %c0_6 = arith.constant 0 : index
    %c0_7 = arith.constant 0 : index
    %22 = vector.load %arg3[%c0_6, %c0_7] : memref<128x128xbf16, #tpu.memory_space<vmem>>, vector<128x128xbf16>
    %cst_8 = arith.constant dense<0.000000e+00> : vector<128x128xf32>
    %23 = tpu.matmul %21, %22, %cst_8 {dimension_numbers = #tpu.dot_dimension_numbers<[1], [0], [0], [1], [0, 0, 1, 1], [], []>} : vector<128x128xbf16>, vector<128x128xbf16>, vector<128x128xf32> -> vector<128x128xf32>
    %c0_9 = arith.constant 0 : index
    %c0_10 = arith.constant 0 : index
    %24 = vector.load %arg4[%c0_9, %c0_10] : memref<128x128xf32, #tpu.memory_space<vmem>>, vector<128x128xf32>
    %25 = arith.addf %24, %23 : vector<128x128xf32>
    %cst_11 = arith.constant 0.000000e+00 : f32
    %26 = vector.broadcast %cst_11 : f32 to vector<128x128xf32>
    %27 = arith.maximumf %25, %26 : vector<128x128xf32>
    %c0_12 = arith.constant 0 : index
    %c0_13 = arith.constant 0 : index
    %28 = vector.load %arg5[%c0_12, %c0_13] : memref<128x128xf32, #tpu.memory_space<vmem>>, vector<128x128xf32>
    tpu.vector_store %arg5[%c0_12, %c0_13], %27 {strides = array<i32>} : memref<128x128xf32, #tpu.memory_space<vmem>>, vector<128x128xf32>,
    return
  }
  func.func @transform_0(%arg0: i32) -> (i32, i32) {
    %c0_i32 = arith.constant 0 : i32
    %c0_i32_0 = arith.constant 0 : i32
    %c0_i32_1 = arith.constant 0 : i32
    return %c0_i32, %c0_i32_0 : i32, i32
  }
  func.func @transform_1(%arg0: i32) -> (i32, i32) {
    %c0_i32 = arith.constant 0 : i32
    %c0_i32_0 = arith.constant 0 : i32
    return %arg0, %c0_i32 : i32, i32
  }
  func.func @transform_2(%arg0: i32) -> (i32, i32) {
    %c0_i32 = arith.constant 0 : i32
    %c0_i32_0 = arith.constant 0 : i32
    %c0_i32_1 = arith.constant 0 : i32
    return %c0_i32, %c0_i32_0 : i32, i32
  }
  func.func @transform_3(%arg0: i32) -> (i32, i32) {
    %c0_i32 = arith.constant 0 : i32
    %c0_i32_0 = arith.constant 0 : i32
    return %arg0, %c0_i32 : i32, i32
  }
  func.func @transform_4(%arg0: i32) -> (i32, i32) {
    %c0_i32 = arith.constant 0 : i32
    %c0_i32_0 = arith.constant 0 : i32
    return %arg0, %c0_i32 : i32, i32
  }
}

module attributes {stable_mosaic.version = 11 : i64} {
  func.func @kernel(%arg0: i32, %arg1: memref<1x128xf32, #tpu.memory_space<vmem>>, %arg2: memref<128x128xbf16, #tpu.memory_space<vmem>>, %arg3: memref<128x128xbf16, #tpu.memory_space<vmem>>, %arg4: memref<128x128xf32, #tpu.memory_space<vmem>>, %arg5: memref<128x128xf32, #tpu.memory_space<vmem>>) attributes {dimension_semantics = [#tpu.dimension_semantics<parallel>], iteration_bounds = array<i64: 1>, scalar_prefetch = 0 : i64, scratch_operands = 0 : i64, tpu.core_type = #tpu.core_type<tc>, window_params = [{pipeline_mode = #tpu.pipeline_mode<synchronous>, transform_indices = @transform_0, window_bounds = array<i64: 1, 128>}, {transform_indices = @transform_1, window_bounds = array<i64: 128, 128>}, {pipeline_mode = #tpu.pipeline_mode<synchronous>, transform_indices = @transform_2, window_bounds = array<i64: 128, 128>}, {transform_indices = @transform_3, window_bounds = array<i64: 128, 128>}, {transform_indices = @transform_4, window_bounds = array<i64: 128, 128>}]} {
    %c0 = arith.constant 0 : index
    %c0_0 = arith.constant 0 : index
    %0 = vector.load %arg1[%c0, %c0_0] : memref<1x128xf32, #tpu.memory_space<vmem>>, vector<1x128xf32>
    %c0_1 = arith.constant 0 : index
    %c0_2 = arith.constant 0 : index
    %1 = vector.load %arg2[%c0_1, %c0_2] : memref<128x128xbf16, #tpu.memory_space<vmem>>, vector<128x128xbf16>
    %2 = arith.extf %1 : vector<128x128xbf16> to vector<128x128xf32>
    %3 = vector.broadcast %0 : vector<1x128xf32> to vector<128x128xf32>
    %4 = arith.addf %3, %2 : vector<128x128xf32>
    %c0_3 = arith.constant 0 : index
    %c32 = arith.constant 32 : index
    %5 = vector.load %arg4[%c0_3, %c32] : memref<128x128xf32, #tpu.memory_space<vmem>>, vector<128x1xf32>
    %6 = vector.broadcast %5 : vector<128x1xf32> to vector<128x128xf32>
    %7 = arith.addf %4, %6 : vector<128x128xf32>
    %cst = arith.constant 0.00999999977 : f32
    %8 = vector.broadcast %cst : f32 to vector<128x128xf32>
    %9 = arith.mulf %8, %7 : vector<128x128xf32>
    %10 = arith.maximumf %7, %9 : vector<128x128xf32>
    %cst_4 = arith.constant dense<0xFF800000> : vector<128xf32>
    %11 = vector.multi_reduction <maximumf>, %10, %cst_4 [1] : vector<128x128xf32> to vector<128xf32>
    %12 = vector.shape_cast %11 : vector<128xf32> to vector<128x1xf32>
    %13 = vector.broadcast %12 : vector<128x1xf32> to vector<128x128xf32>
    %14 = arith.subf %10, %13 : vector<128x128xf32>
    %15 = math.exp %14 : vector<128x128xf32>
    %cst_5 = arith.constant dense<0.000000e+00> : vector<128xf32>
    %16 = vector.multi_reduction <add>, %15, %cst_5 [1] : vector<128x128xf32> to vector<128xf32>
    %17 = vector.shape_cast %16 : vector<128xf32> to vector<128x1xf32>
    %18 = tpu.reciprocal %17 {approx = true} : vector<128x1xf32> -> vector<128x1xf32>
    %19 = vector.broadcast %18 : vector<128x1xf32> to vector<128x128xf32>
    %20 = arith.mulf %15, %19 : vector<128x128xf32>
    %21 = arith.truncf %20 : vector<128x128xf32> to vector<128x128xbf16>
    %c0_6 = arith.constant 0 : index
    %c0_7 = arith.constant 0 : index
    %22 = vector.load %arg3[%c0_6, %c0_7] : memref<128x128xbf16, #tpu.memory_space<vmem>>, vector<128x128xbf16>
    %cst_8 = arith.constant dense<0.000000e+00> : vector<128x128xf32>
    %23 = tpu.matmul %21, %22, %cst_8 {dimension_numbers = #tpu.dot_dimension_numbers<[1], [0], [0], [1], [0, 0, 1, 1], [], []>} : vector<128x128xbf16>, vector<128x128xbf16>, vector<128x128xf32> -> vector<128x128xf32>
    %c0_9 = arith.constant 0 : index
    %c0_10 = arith.constant 0 : index
    %24 = vector.load %arg4[%c0_9, %c0_10] : memref<128x128xf32, #tpu.memory_space<vmem>>, vector<128x128xf32>
    %25 = arith.addf %24, %23 : vector<128x128xf32>
    %cst_11 = arith.constant 0.000000e+00 : f32
    %26 = vector.broadcast %cst_11 : f32 to vector<128x128xf32>
    %27 = arith.maximumf %25, %26 : vector<128x128xf32>
    %c0_12 = arith.constant 0 : index
    %c0_13 = arith.constant 0 : index
    %28 = vector.load %arg5[%c0_12, %c0_13] : memref<128x128xf32, #tpu.memory_space<vmem>>, vector<128x128xf32>
    tpu.vector_store %arg5[%c0_12, %c0_13], %27 {strides = array<i32>} : memref<128x128xf32, #tpu.memory_space<vmem>>, vector<128x128xf32>,
    return
  }
  func.func @transform_0(%arg0: i32) -> (i32, i32) {
    %c0_i32 = arith.constant 0 : i32
    %c0_i32_0 = arith.constant 0 : i32
    %c0_i32_1 = arith.constant 0 : i32
    return %c0_i32, %c0_i32_0 : i32, i32
  }
  func.func @transform_1(%arg0: i32) -> (i32, i32) {
    %c0_i32 = arith.constant 0 : i32
    %c0_i32_0 = arith.constant 0 : i32
    return %arg0, %c0_i32 : i32, i32
  }
  func.func @transform_2(%arg0: i32) -> (i32, i32) {
    %c0_i32 = arith.constant 0 : i32
    %c0_i32_0 = arith.constant 0 : i32
    %c0_i32_1 = arith.constant 0 : i32
    return %c0_i32, %c0_i32_0 : i32, i32
  }
  func.func @transform_3(%arg0: i32) -> (i32, i32) {
    %c0_i32 = arith.constant 0 : i32
    %c0_i32_0 = arith.constant 0 : i32
    return %arg0, %c0_i32 : i32, i32
  }
  func.func @transform_4(%arg0: i32) -> (i32, i32) {
    %c0_i32 = arith.constant 0 : i32
    %c0_i32_0 = arith.constant 0 : i32
    return %arg0, %c0_i32 : i32, i32
  }
}

</mosaic_0001>

<llo_original>
// kernel: tpu_custom_call.1
$region0: #{tpu_custom_call.1}
  #allocation0 [shape = 'u32[]', space=smem, size = 0x4, offset = 0x4, fixed_abs, tag = 'smem constant byte address 0x4 - core index']
  #allocation1 [shape = 'u32[72,128]{1,0:T(1,128)}', space=vmem, size = 0x9000, scoped, tag = 'internal scratch']
  %s0 = inlined_call_operand.hbm [shape: f32[1,128], index: 0, kind: input, shape index: {}]
  %s1 = inlined_call_operand.hbm [shape: bf16[128,128], index: 1, kind: input, shape index: {}]
  %s2 = inlined_call_operand.hbm [shape: bf16[128,128], index: 2, kind: input, shape index: {}]
  %s3 = inlined_call_operand.hbm [shape: f32[128,128], index: 3, kind: input, shape index: {}]
  %s4 = inlined_call_operand.hbm [shape: f32[128,128], index: 4, kind: output, shape index: {}]
  %s5 = sld [smem:[#allocation0]]
  $region42: #{tpu_custom_call.1} parent=0
    _
  %s7 = ssub.s32 1, %s5
  %s8 = scalar_select 0, %s7, %s5
  $region1: #{tpu_custom_call.1} parent=0
    #allocation2 [shape = 'u8[512]{0}', space=vmem, size = 0x400, scoped, tag = 'input window, operand 0, single buffered']
    #allocation3 [shape = 's32[1]{0}', space=sflag, size = 0x4, scoped, tag = 'scoped memory for tpu_custom_call.1']
    #allocation4 [shape = 's32[1]{0}', space=sflag, size = 0x4, scoped, tag = 'scoped memory for tpu_custom_call.1']
    #allocation5 [shape = 'u8[32768]{0}', space=vmem, size = 0x8000, scoped, tag = 'input window, operand 1, single buffered']
    #allocation6 [shape = 's32[1]{0}', space=sflag, size = 0x4, scoped, tag = 'scoped memory for tpu_custom_call.1']
    #allocation7 [shape = 'u8[32768]{0}', space=vmem, size = 0x8000, scoped, tag = 'input window, operand 2, single buffered']
    #allocation8 [shape = 'u8[65536]{0}', space=vmem, size = 0x10000, scoped, tag = 'input window, operand 3, single buffered']
    #allocation9 [shape = 's32[1]{0}', space=sflag, size = 0x4, scoped, tag = 'scoped memory for tpu_custom_call.1']
    #allocation10 [shape = 'u8[65536]{0}', space=vmem, size = 0x10000, scoped, tag = 'output window, operand 0, single buffered']
    %9 = vsyncpa [#allocation3], 0
    %10 = vsyncpa [#allocation6], 0
    %11 = vsyncpa [#allocation9], 0
    %12 = vsyncpa [#allocation4], 0
    // Predicated region
    $region2: #{tpu_custom_call.1} parent=1 // pred_check
      _
    $region3: #{tpu_custom_call.1} parent=1 // pred_check_branch
      %14 = sbr.rel (0) target = $region5
    $region4: #{tpu_custom_call.1} parent=1 // pred_region
      %16 = vsyncadd [#allocation3], 0
      %s18 = sshll.u32 %s0, 4
      %s19 = int_to_ptr.hbm [resolvable:$true] %s18
      %s20 = sshll.u32 [#allocation2], 4
      %s21 = int_to_ptr.vmem [resolvable:$true] %s20
      %23 = dma.hbm_to_vmem [thread:$0]  %s19, 16, %s21, [#allocation3]
    $region5: #{tpu_custom_call.1} parent=1 // pred_fallthru
      _
    // Predicated region
    $region6: #{tpu_custom_call.1} parent=1 // pred_check
      _
    $region7: #{tpu_custom_call.1} parent=1 // pred_check_branch
      %25 = sbr.rel (0) target = $region9
    $region8: #{tpu_custom_call.1} parent=1 // pred_region
      %27 = vsyncadd [#allocation6], 0
      %s28 = sshll.u32 %s1, 4
      %s29 = int_to_ptr.hbm [resolvable:$true] %s28
      %s30 = sshll.u32 [#allocation5], 4
      %s31 = int_to_ptr.vmem [resolvable:$true] %s30
      %36 = dma.hbm_to_vmem [thread:$0]  %s29, 1024, %s31, [#allocation6], 64, 64, 4
    $region9: #{tpu_custom_call.1} parent=1 // pred_fallthru
      _
    // Predicated region
    $region10: #{tpu_custom_call.1} parent=1 // pred_check
      _
    $region11: #{tpu_custom_call.1} parent=1 // pred_check_branch
      %38 = sbr.rel (0) target = $region13
    $region12: #{tpu_custom_call.1} parent=1 // pred_region
      %40 = vsyncadd [#allocation6], 0
      %s41 = sshll.u32 %s2, 4
      %s42 = int_to_ptr.hbm [resolvable:$true] %s41
      %s43 = sshll.u32 [#allocation7], 4
      %s44 = int_to_ptr.vmem [resolvable:$true] %s43
      %49 = dma.hbm_to_vmem [thread:$0]  %s42, 1024, %s44, [#allocation6], 64, 64, 4
    $region13: #{tpu_custom_call.1} parent=1 // pred_fallthru
      _
    // Predicated region
    $region14: #{tpu_custom_call.1} parent=1 // pred_check
      _
    $region15: #{tpu_custom_call.1} parent=1 // pred_check_branch
      %51 = sbr.rel (0) target = $region17
    $region16: #{tpu_custom_call.1} parent=1 // pred_region
      %53 = vsyncadd [#allocation9], 0
      %s54 = sshll.u32 %s3, 4
      %s55 = int_to_ptr.hbm [resolvable:$true] %s54
      %s56 = sshll.u32 [#allocation8], 4
      %s57 = int_to_ptr.vmem [resolvable:$true] %s56
      %62 = dma.hbm_to_vmem [thread:$0]  %s55, 2048, %s57, [#allocation9], 128, 128, 8
    $region17: #{tpu_custom_call.1} parent=1 // pred_fallthru
      _
    // Predicated region
    $region18: #{tpu_custom_call.1} parent=1 // pred_check
      _
    $region19: #{tpu_custom_call.1} parent=1 // pred_check_branch
      %64 = sbr.rel (0) target = $region21
    $region20: #{tpu_custom_call.1} parent=1 // pred_region
      %66 = dma.done [#allocation3], 16
    $region21: #{tpu_custom_call.1} parent=1 // pred_fallthru
      _
    // Predicated region
    $region22: #{tpu_custom_call.1} parent=1 // pred_check
      _
    $region23: #{tpu_custom_call.1} parent=1 // pred_check_branch
      %68 = sbr.rel (0) target = $region25
    $region24: #{tpu_custom_call.1} parent=1 // pred_region
      %70 = dma.done [#allocation6], 1024
    $region25: #{tpu_custom_call.1} parent=1 // pred_fallthru
      _
    // Predicated region
    $region26: #{tpu_custom_call.1} parent=1 // pred_check
      _
    $region27: #{tpu_custom_call.1} parent=1 // pred_check_branch
      %72 = sbr.rel (0) target = $region29
    $region28: #{tpu_custom_call.1} parent=1 // pred_region
      %74 = dma.done [#allocation6], 1024
    $region29: #{tpu_custom_call.1} parent=1 // pred_fallthru
      _
    // Predicated region
    $region30: #{tpu_custom_call.1} parent=1 // pred_check
      _
    $region31: #{tpu_custom_call.1} parent=1 // pred_check_branch
      %76 = sbr.rel (0) target = $region33
    $region32: #{tpu_custom_call.1} parent=1 // pred_region
      %78 = dma.done [#allocation9], 2048
    $region33: #{tpu_custom_call.1} parent=1 // pred_fallthru
      _
    %v79 = vld [vmem:[#allocation2] sm:$0x1]
    %v80 = vld [vmem:[#allocation5] sm:$0xf]
    %v81 = vld [vmem:[#allocation5 + $0x4] sm:$0xf]
    %v82 = vld [vmem:[#allocation5 + $0x8] sm:$0xf]
    %v83 = vld [vmem:[#allocation5 + $0xc] sm:$0xf]
    %v84 = vld [vmem:[#allocation5 + $0x10] sm:$0xf]
    %v85 = vld [vmem:[#allocation5 + $0x14] sm:$0xf]
    %v86 = vld [vmem:[#allocation5 + $0x18] sm:$0xf]
    %v87 = vld [vmem:[#allocation5 + $0x1c] sm:$0xf]
    %v88 = vld [vmem:[#allocation5 + $0x20] sm:$0xf]
    %v89 = vld [vmem:[#allocation5 + $0x24] sm:$0xf]
    %v90 = vld [vmem:[#allocation5 + $0x28] sm:$0xf]
    %v91 = vld [vmem:[#allocation5 + $0x2c] sm:$0xf]
    %v92 = vld [vmem:[#allocation5 + $0x30] sm:$0xf]
    %v93 = vld [vmem:[#allocation5 + $0x34] sm:$0xf]
    %v94 = vld [vmem:[#allocation5 + $0x38] sm:$0xf]
    %v95 = vld [vmem:[#allocation5 + $0x3c] sm:$0xf]
    %v96 = vunpack.c.l.bf16 %v80
    %v97 = vunpack.c.l.bf16 %v81
    %v98 = vunpack.c.l.bf16 %v82
    %v99 = vunpack.c.l.bf16 %v83
    %v100 = vunpack.c.l.bf16 %v84
    %v101 = vunpack.c.l.bf16 %v85
    %v102 = vunpack.c.l.bf16 %v86
    %v103 = vunpack.c.l.bf16 %v87
    %v104 = vunpack.c.l.bf16 %v88
    %v105 = vunpack.c.l.bf16 %v89
    %v106 = vunpack.c.l.bf16 %v90
    %v107 = vunpack.c.l.bf16 %v91
    %v108 = vunpack.c.l.bf16 %v92
    %v109 = vunpack.c.l.bf16 %v93
    %v110 = vunpack.c.l.bf16 %v94
    %v111 = vunpack.c.l.bf16 %v95
    %v113 = vperm.slane %v79, 0
    %v115 = vadd.f32 %v113, %v96
    %v116 = vadd.f32 %v113, %v97
    %v117 = vadd.f32 %v113, %v98
    %v118 = vadd.f32 %v113, %v99
    %v119 = vadd.f32 %v113, %v100
    %v120 = vadd.f32 %v113, %v101
    %v121 = vadd.f32 %v113, %v102
    %v122 = vadd.f32 %v113, %v103
    %v123 = vadd.f32 %v113, %v104
    %v124 = vadd.f32 %v113, %v105
    %v125 = vadd.f32 %v113, %v106
    %v126 = vadd.f32 %v113, %v107
    %v127 = vadd.f32 %v113, %v108
    %v128 = vadd.f32 %v113, %v109
    %v129 = vadd.f32 %v113, %v110
    %v130 = vadd.f32 %v113, %v111
    %v131 = vld [vmem:[#allocation8] sm:$0xff]
    %v132 = vld [vmem:[#allocation8 + $0x8] sm:$0xff]
    %v133 = vld [vmem:[#allocation8 + $0x10] sm:$0xff]
    %v134 = vld [vmem:[#allocation8 + $0x18] sm:$0xff]
    %v135 = vld [vmem:[#allocation8 + $0x20] sm:$0xff]
    %v136 = vld [vmem:[#allocation8 + $0x28] sm:$0xff]
    %v137 = vld [vmem:[#allocation8 + $0x30] sm:$0xff]
    %v138 = vld [vmem:[#allocation8 + $0x38] sm:$0xff]
    %v139 = vld [vmem:[#allocation8 + $0x40] sm:$0xff]
    %v140 = vld [vmem:[#allocation8 + $0x48] sm:$0xff]
    %v141 = vld [vmem:[#allocation8 + $0x50] sm:$0xff]
    %v142 = vld [vmem:[#allocation8 + $0x58] sm:$0xff]
    %v143 = vld [vmem:[#allocation8 + $0x60] sm:$0xff]
    %v144 = vld [vmem:[#allocation8 + $0x68] sm:$0xff]
    %v145 = vld [vmem:[#allocation8 + $0x70] sm:$0xff]
    %v146 = vld [vmem:[#allocation8 + $0x78] sm:$0xff]
    %148 = vset.pattern.permute.xlu0 32
    %149 = vperm.xlu0 %148, %v131
    %v150 = vpop.permute.xlu0 %149
    %153 = vset.pattern.permute.xlu0 32
    %154 = vperm.xlu0 %153, %v132
    %v155 = vpop.permute.xlu0 %154
    %158 = vset.pattern.permute.xlu0 32
    %159 = vperm.xlu0 %158, %v133
    %v160 = vpop.permute.xlu0 %159
    %163 = vset.pattern.permute.xlu0 32
    %164 = vperm.xlu0 %163, %v134
    %v165 = vpop.permute.xlu0 %164
    %168 = vset.pattern.permute.xlu0 32
    %169 = vperm.xlu0 %168, %v135
    %v170 = vpop.permute.xlu0 %169
    %173 = vset.pattern.permute.xlu0 32
    %174 = vperm.xlu0 %173, %v136
    %v175 = vpop.permute.xlu0 %174
    %178 = vset.pattern.permute.xlu0 32
    %179 = vperm.xlu0 %178, %v137
    %v180 = vpop.permute.xlu0 %179
    %183 = vset.pattern.permute.xlu0 32
    %184 = vperm.xlu0 %183, %v138
    %v185 = vpop.permute.xlu0 %184
    %188 = vset.pattern.permute.xlu0 32
    %189 = vperm.xlu0 %188, %v139
    %v190 = vpop.permute.xlu0 %189
    %193 = vset.pattern.permute.xlu0 32
    %194 = vperm.xlu0 %193, %v140
    %v195 = vpop.permute.xlu0 %194
    %198 = vset.pattern.permute.xlu0 32
    %199 = vperm.xlu0 %198, %v141
    %v200 = vpop.permute.xlu0 %199
    %203 = vset.pattern.permute.xlu0 32
    %204 = vperm.xlu0 %203, %v142
    %v205 = vpop.permute.xlu0 %204
    %208 = vset.pattern.permute.xlu0 32
    %209 = vperm.xlu0 %208, %v143
    %v210 = vpop.permute.xlu0 %209
    %213 = vset.pattern.permute.xlu0 32
    %214 = vperm.xlu0 %213, %v144
    %v215 = vpop.permute.xlu0 %214
    %218 = vset.pattern.permute.xlu0 32
    %219 = vperm.xlu0 %218, %v145
    %v220 = vpop.permute.xlu0 %219
    %223 = vset.pattern.permute.xlu0 32
    %224 = vperm.xlu0 %223, %v146
    %v225 = vpop.permute.xlu0 %224
    %v227 = vadd.f32 %v115, %v150
    %v228 = vadd.f32 %v116, %v155
    %v229 = vadd.f32 %v117, %v160
    %v230 = vadd.f32 %v118, %v165
    %v231 = vadd.f32 %v119, %v170
    %v232 = vadd.f32 %v120, %v175
    %v233 = vadd.f32 %v121, %v180
    %v234 = vadd.f32 %v122, %v185
    %v235 = vadd.f32 %v123, %v190
    %v236 = vadd.f32 %v124, %v195
    %v237 = vadd.f32 %v125, %v200
    %v238 = vadd.f32 %v126, %v205
    %v239 = vadd.f32 %v127, %v210
    %v240 = vadd.f32 %v128, %v215
    %v241 = vadd.f32 %v129, %v220
    %v242 = vadd.f32 %v130, %v225
    %v243 = vmul.f32 %v227, 0.01
    %v244 = vmul.f32 %v228, 0.01
    %v245 = vmul.f32 %v229, 0.01
    %v246 = vmul.f32 %v230, 0.01
    %v247 = vmul.f32 %v231, 0.01
    %v248 = vmul.f32 %v232, 0.01
    %v249 = vmul.f32 %v233, 0.01
    %v250 = vmul.f32 %v234, 0.01
    %v251 = vmul.f32 %v235, 0.01
    %v252 = vmul.f32 %v236, 0.01
    %v253 = vmul.f32 %v237, 0.01
    %v254 = vmul.f32 %v238, 0.01
    %v255 = vmul.f32 %v239, 0.01
    %v256 = vmul.f32 %v240, 0.01
    %v257 = vmul.f32 %v241, 0.01
    %v258 = vmul.f32 %v242, 0.01
    %v259 = vmax.f32 %v227, %v243
    %v260 = vmax.f32 %v228, %v244
    %v261 = vmax.f32 %v229, %v245
    %v262 = vmax.f32 %v230, %v246
    %v263 = vmax.f32 %v231, %v247
    %v264 = vmax.f32 %v232, %v248
    %v265 = vmax.f32 %v233, %v249
    %v266 = vmax.f32 %v234, %v250
    %v267 = vmax.f32 %v235, %v251
    %v268 = vmax.f32 %v236, %v252
    %v269 = vmax.f32 %v237, %v253
    %v270 = vmax.f32 %v238, %v254
    %v271 = vmax.f32 %v239, %v255
    %v272 = vmax.f32 %v240, %v256
    %v273 = vmax.f32 %v241, %v257
    %v274 = vmax.f32 %v242, %v258
    %275 = vmax.xlane.f32.xlu0 %v259
    %v276 = vpop.xlane.xlu0 %275
    %277 = vmax.xlane.f32.xlu0 %v260
    %v278 = vpop.xlane.xlu0 %277
    %279 = vmax.xlane.f32.xlu0 %v261
    %v280 = vpop.xlane.xlu0 %279
    %281 = vmax.xlane.f32.xlu0 %v262
    %v282 = vpop.xlane.xlu0 %281
    %283 = vmax.xlane.f32.xlu0 %v263
    %v284 = vpop.xlane.xlu0 %283
    %285 = vmax.xlane.f32.xlu0 %v264
    %v286 = vpop.xlane.xlu0 %285
    %287 = vmax.xlane.f32.xlu0 %v265
    %v288 = vpop.xlane.xlu0 %287
    %289 = vmax.xlane.f32.xlu0 %v266
    %v290 = vpop.xlane.xlu0 %289
    %291 = vmax.xlane.f32.xlu0 %v267
    %v292 = vpop.xlane.xlu0 %291
    %293 = vmax.xlane.f32.xlu0 %v268
    %v294 = vpop.xlane.xlu0 %293
    %295 = vmax.xlane.f32.xlu0 %v269
    %v296 = vpop.xlane.xlu0 %295
    %297 = vmax.xlane.f32.xlu0 %v270
    %v298 = vpop.xlane.xlu0 %297
    %299 = vmax.xlane.f32.xlu0 %v271
    %v300 = vpop.xlane.xlu0 %299
    %301 = vmax.xlane.f32.xlu0 %v272
    %v302 = vpop.xlane.xlu0 %301
    %303 = vmax.xlane.f32.xlu0 %v273
    %v304 = vpop.xlane.xlu0 %303
    %305 = vmax.xlane.f32.xlu0 %v274
    %v306 = vpop.xlane.xlu0 %305
    %v307 = vsub.f32 %v259, %v276
    %v308 = vsub.f32 %v260, %v278
    %v309 = vsub.f32 %v261, %v280
    %v310 = vsub.f32 %v262, %v282
    %v311 = vsub.f32 %v263, %v284
    %v312 = vsub.f32 %v264, %v286
    %v313 = vsub.f32 %v265, %v288
    %v314 = vsub.f32 %v266, %v290
    %v315 = vsub.f32 %v267, %v292
    %v316 = vsub.f32 %v268, %v294
    %v317 = vsub.f32 %v269, %v296
    %v318 = vsub.f32 %v270, %v298
    %v319 = vsub.f32 %v271, %v300
    %v320 = vsub.f32 %v272, %v302
    %v321 = vsub.f32 %v273, %v304
    %v322 = vsub.f32 %v274, %v306
    %v323 = vmul.f32 %v307, 1.442695
    %v324 = vpow.pop %v323
    %v325 = vmul.f32 %v308, 1.442695
    %v326 = vpow.pop %v325
    %v327 = vmul.f32 %v309, 1.442695
    %v328 = vpow.pop %v327
    %v329 = vmul.f32 %v310, 1.442695
    %v330 = vpow.pop %v329
    %v331 = vmul.f32 %v311, 1.442695
    %v332 = vpow.pop %v331
    %v333 = vmul.f32 %v312, 1.442695
    %v334 = vpow.pop %v333
    %v335 = vmul.f32 %v313, 1.442695
    %v336 = vpow.pop %v335
    %v337 = vmul.f32 %v314, 1.442695
    %v338 = vpow.pop %v337
    %v339 = vmul.f32 %v315, 1.442695
    %v340 = vpow.pop %v339
    %v341 = vmul.f32 %v316, 1.442695
    %v342 = vpow.pop %v341
    %v343 = vmul.f32 %v317, 1.442695
    %v344 = vpow.pop %v343
    %v345 = vmul.f32 %v318, 1.442695
    %v346 = vpow.pop %v345
    %v347 = vmul.f32 %v319, 1.442695
    %v348 = vpow.pop %v347
    %v349 = vmul.f32 %v320, 1.442695
    %v350 = vpow.pop %v349
    %v351 = vmul.f32 %v321, 1.442695
    %v352 = vpow.pop %v351
    %v353 = vmul.f32 %v322, 1.442695
    %v354 = vpow.pop %v353
    %355 = vadd.xlane.f32.xlu0 %v324
    %v356 = vpop.xlane.xlu0 %355
    %357 = vadd.xlane.f32.xlu0 %v326
    %v358 = vpop.xlane.xlu0 %357
    %359 = vadd.xlane.f32.xlu0 %v328
    %v360 = vpop.xlane.xlu0 %359
    %361 = vadd.xlane.f32.xlu0 %v330
    %v362 = vpop.xlane.xlu0 %361
    %363 = vadd.xlane.f32.xlu0 %v332
    %v364 = vpop.xlane.xlu0 %363
    %365 = vadd.xlane.f32.xlu0 %v334
    %v366 = vpop.xlane.xlu0 %365
    %367 = vadd.xlane.f32.xlu0 %v336
    %v368 = vpop.xlane.xlu0 %367
    %369 = vadd.xlane.f32.xlu0 %v338
    %v370 = vpop.xlane.xlu0 %369
    %371 = vadd.xlane.f32.xlu0 %v340
    %v372 = vpop.xlane.xlu0 %371
    %373 = vadd.xlane.f32.xlu0 %v342
    %v374 = vpop.xlane.xlu0 %373
    %375 = vadd.xlane.f32.xlu0 %v344
    %v376 = vpop.xlane.xlu0 %375
    %377 = vadd.xlane.f32.xlu0 %v346
    %v378 = vpop.xlane.xlu0 %377
    %379 = vadd.xlane.f32.xlu0 %v348
    %v380 = vpop.xlane.xlu0 %379
    %381 = vadd.xlane.f32.xlu0 %v350
    %v382 = vpop.xlane.xlu0 %381
    %383 = vadd.xlane.f32.xlu0 %v352
    %v384 = vpop.xlane.xlu0 %383
    %385 = vadd.xlane.f32.xlu0 %v354
    %v386 = vpop.xlane.xlu0 %385
    %v387 = vrcp.pop %v356
    %v388 = vrcp.pop %v358
    %v389 = vrcp.pop %v360
    %v390 = vrcp.pop %v362
    %v391 = vrcp.pop %v364
    %v392 = vrcp.pop %v366
    %v393 = vrcp.pop %v368
    %v394 = vrcp.pop %v370
    %v395 = vrcp.pop %v372
    %v396 = vrcp.pop %v374
    %v397 = vrcp.pop %v376
    %v398 = vrcp.pop %v378
    %v399 = vrcp.pop %v380
    %v400 = vrcp.pop %v382
    %v401 = vrcp.pop %v384
    %v402 = vrcp.pop %v386
    %v403 = vmul.f32 %v324, %v387
    %v404 = vmul.f32 %v326, %v388
    %v405 = vmul.f32 %v328, %v389
    %v406 = vmul.f32 %v330, %v390
    %v407 = vmul.f32 %v332, %v391
    %v408 = vmul.f32 %v334, %v392
    %v409 = vmul.f32 %v336, %v393
    %v410 = vmul.f32 %v338, %v394
    %v411 = vmul.f32 %v340, %v395
    %v412 = vmul.f32 %v342, %v396
    %v413 = vmul.f32 %v344, %v397
    %v414 = vmul.f32 %v346, %v398
    %v415 = vmul.f32 %v348, %v399
    %v416 = vmul.f32 %v350, %v400
    %v417 = vmul.f32 %v352, %v401
    %v418 = vmul.f32 %v354, %v402
    %v419 = vpack.c.bf16 %v404, %v403
    %v420 = vpack.c.bf16 %v406, %v405
    %v421 = vpack.c.bf16 %v408, %v407
    %v422 = vpack.c.bf16 %v410, %v409
    %v423 = vpack.c.bf16 %v412, %v411
    %v424 = vpack.c.bf16 %v414, %v413
    %v425 = vpack.c.bf16 %v416, %v415
    %v426 = vpack.c.bf16 %v418, %v417
    %v427 = vld [vmem:[#allocation7] sm:$0xf]
    %v428 = vld [vmem:[#allocation7 + $0x4] sm:$0xf]
    %v429 = vld [vmem:[#allocation7 + $0x8] sm:$0xf]
    %v430 = vld [vmem:[#allocation7 + $0xc] sm:$0xf]
    %v431 = vld [vmem:[#allocation7 + $0x10] sm:$0xf]
    %v432 = vld [vmem:[#allocation7 + $0x14] sm:$0xf]
    %v433 = vld [vmem:[#allocation7 + $0x18] sm:$0xf]
    %v434 = vld [vmem:[#allocation7 + $0x1c] sm:$0xf]
    %v435 = vld [vmem:[#allocation7 + $0x20] sm:$0xf]
    %v436 = vld [vmem:[#allocation7 + $0x24] sm:$0xf]
    %v437 = vld [vmem:[#allocation7 + $0x28] sm:$0xf]
    %v438 = vld [vmem:[#allocation7 + $0x2c] sm:$0xf]
    %v439 = vld [vmem:[#allocation7 + $0x30] sm:$0xf]
    %v440 = vld [vmem:[#allocation7 + $0x34] sm:$0xf]
    %v441 = vld [vmem:[#allocation7 + $0x38] sm:$0xf]
    %v442 = vld [vmem:[#allocation7 + $0x3c] sm:$0xf]
    %v459 = vunpack.c.l.b16 %v427
    %v460 = vunpack.c.l.b16 %v428
    %v461 = vunpack.c.l.b16 %v429
    %v462 = vunpack.c.l.b16 %v430
    %v463 = vunpack.c.l.b16 %v431
    %v464 = vunpack.c.l.b16 %v432
    %v465 = vunpack.c.l.b16 %v433
    %v466 = vunpack.c.l.b16 %v434
    %v467 = vunpack.c.l.b16 %v435
    %v468 = vunpack.c.l.b16 %v436
    %v469 = vunpack.c.l.b16 %v437
    %v470 = vunpack.c.l.b16 %v438
    %v471 = vunpack.c.l.b16 %v439
    %v472 = vunpack.c.l.b16 %v440
    %v473 = vunpack.c.l.b16 %v441
    %v474 = vunpack.c.l.b16 %v442
    %v475 = vpack.c.b16 %v460, %v459
    %v476 = vpack.c.b16 %v462, %v461
    %v477 = vpack.c.b16 %v464, %v463
    %v478 = vpack.c.b16 %v466, %v465
    %v479 = vpack.c.b16 %v468, %v467
    %v480 = vpack.c.b16 %v470, %v469
    %v481 = vpack.c.b16 %v472, %v471
    %v482 = vpack.c.b16 %v474, %v473
    %491 = vmatpush.bf16.msra.mxu0 %v482
    %492 = vmatpush.bf16.msra.mxu0 %v481
    %493 = vmatpush.bf16.msra.mxu0 %v480
    %494 = vmatpush.bf16.msra.mxu0 %v479
    %495 = vmatpush.bf16.msra.mxu0 %v478
    %496 = vmatpush.bf16.msra.mxu0 %v477
    %497 = vmatpush.bf16.msra.mxu0 %v476
    %498 = vmatpush.bf16.msra.mxu0 %v475
    %499 = vmatmul.bf16.gmra.mxu0 %v419
    %v500 = vpop.f32.mrf.mxu0
    %v501 = vadd.f32 0.0, %v500
    %v502 = vpop.f32.mrf.mxu0
    %v503 = vadd.f32 0.0, %v502
    %504 = vmatmul.bf16.gmra.mxu0 %v420
    %v505 = vpop.f32.mrf.mxu0
    %v506 = vadd.f32 0.0, %v505
    %v507 = vpop.f32.mrf.mxu0
    %v508 = vadd.f32 0.0, %v507
    %509 = vmatmul.bf16.gmra.mxu0 %v421
    %v510 = vpop.f32.mrf.mxu0
    %v511 = vadd.f32 0.0, %v510
    %v512 = vpop.f32.mrf.mxu0
    %v513 = vadd.f32 0.0, %v512
    %514 = vmatmul.bf16.gmra.mxu0 %v422
    %v515 = vpop.f32.mrf.mxu0
    %v516 = vadd.f32 0.0, %v515
    %v517 = vpop.f32.mrf.mxu0
    %v518 = vadd.f32 0.0, %v517
    %519 = vmatmul.bf16.gmra.mxu0 %v423
    %v520 = vpop.f32.mrf.mxu0
    %v521 = vadd.f32 0.0, %v520
    %v522 = vpop.f32.mrf.mxu0
    %v523 = vadd.f32 0.0, %v522
    %524 = vmatmul.bf16.gmra.mxu0 %v424
    %v525 = vpop.f32.mrf.mxu0
    %v526 = vadd.f32 0.0, %v525
    %v527 = vpop.f32.mrf.mxu0
    %v528 = vadd.f32 0.0, %v527
    %529 = vmatmul.bf16.gmra.mxu0 %v425
    %v530 = vpop.f32.mrf.mxu0
    %v531 = vadd.f32 0.0, %v530
    %v532 = vpop.f32.mrf.mxu0
    %v533 = vadd.f32 0.0, %v532
    %534 = vmatmul.bf16.gmra.mxu0 %v426
    %v535 = vpop.f32.mrf.mxu0
    %v536 = vadd.f32 0.0, %v535
    %v537 = vpop.f32.mrf.mxu0
    %v538 = vadd.f32 0.0, %v537
    %539 = vdwg.mxu0
    %v540 = vadd.f32 %v131, %v501
    %v541 = vadd.f32 %v132, %v503
    %v542 = vadd.f32 %v133, %v506
    %v543 = vadd.f32 %v134, %v508
    %v544 = vadd.f32 %v135, %v511
    %v545 = vadd.f32 %v136, %v513
    %v546 = vadd.f32 %v137, %v516
    %v547 = vadd.f32 %v138, %v518
    %v548 = vadd.f32 %v139, %v521
    %v549 = vadd.f32 %v140, %v523
    %v550 = vadd.f32 %v141, %v526
    %v551 = vadd.f32 %v142, %v528
    %v552 = vadd.f32 %v143, %v531
    %v553 = vadd.f32 %v144, %v533
    %v554 = vadd.f32 %v145, %v536
    %v555 = vadd.f32 %v146, %v538
    %v556 = vmax.f32 %v540, 0.0
    %v557 = vmax.f32 %v541, 0.0
    %v558 = vmax.f32 %v542, 0.0
    %v559 = vmax.f32 %v543, 0.0
    %v560 = vmax.f32 %v544, 0.0
    %v561 = vmax.f32 %v545, 0.0
    %v562 = vmax.f32 %v546, 0.0
    %v563 = vmax.f32 %v547, 0.0
    %v564 = vmax.f32 %v548, 0.0
    %v565 = vmax.f32 %v549, 0.0
    %v566 = vmax.f32 %v550, 0.0
    %v567 = vmax.f32 %v551, 0.0
    %v568 = vmax.f32 %v552, 0.0
    %v569 = vmax.f32 %v553, 0.0
    %v570 = vmax.f32 %v554, 0.0
    %v571 = vmax.f32 %v555, 0.0
    %572 = vst [vmem:[#allocation10] sm:$0xff] %v556
    %573 = vst [vmem:[#allocation10 + $0x8] sm:$0xff] %v557
    %574 = vst [vmem:[#allocation10 + $0x10] sm:$0xff] %v558
    %575 = vst [vmem:[#allocation10 + $0x18] sm:$0xff] %v559
    %576 = vst [vmem:[#allocation10 + $0x20] sm:$0xff] %v560
    %577 = vst [vmem:[#allocation10 + $0x28] sm:$0xff] %v561
    %578 = vst [vmem:[#allocation10 + $0x30] sm:$0xff] %v562
    %579 = vst [vmem:[#allocation10 + $0x38] sm:$0xff] %v563
    %580 = vst [vmem:[#allocation10 + $0x40] sm:$0xff] %v564
    %581 = vst [vmem:[#allocation10 + $0x48] sm:$0xff] %v565
    %582 = vst [vmem:[#allocation10 + $0x50] sm:$0xff] %v566
    %583 = vst [vmem:[#allocation10 + $0x58] sm:$0xff] %v567
    %584 = vst [vmem:[#allocation10 + $0x60] sm:$0xff] %v568
    %585 = vst [vmem:[#allocation10 + $0x68] sm:$0xff] %v569
    %586 = vst [vmem:[#allocation10 + $0x70] sm:$0xff] %v570
    %587 = vst [vmem:[#allocation10 + $0x78] sm:$0xff] %v571
    // Predicated region
    $region34: #{tpu_custom_call.1} parent=1 // pred_check
      _
    $region35: #{tpu_custom_call.1} parent=1 // pred_check_branch
      %589 = sbr.rel (0) target = $region37
    $region36: #{tpu_custom_call.1} parent=1 // pred_region
      %591 = vsyncadd [#allocation4], 0
      %s592 = sshll.u32 [#allocation10], 4
      %s593 = int_to_ptr.vmem [resolvable:$true] %s592
      %s594 = sshll.u32 %s4, 4
      %s595 = int_to_ptr.hbm [resolvable:$true] %s594
      %600 = dma.vmem_to_hbm [thread:$0]  %s593, 2048, %s595, [#allocation4], 128, 128, 8
    $region37: #{tpu_custom_call.1} parent=1 // pred_fallthru
      _
    // Predicated region
    $region38: #{tpu_custom_call.1} parent=1 // pred_check
      _
    $region39: #{tpu_custom_call.1} parent=1 // pred_check_branch
      %602 = sbr.rel (0) target = $region41
    $region40: #{tpu_custom_call.1} parent=1 // pred_region
      %604 = dma.done [#allocation4], 2048
    $region41: #{tpu_custom_call.1} parent=1 // pred_fallthru
      _
    %605 = vsyncpa [#allocation3], 1
    %606 = vsyncpa [#allocation6], 1
    %607 = vsyncpa [#allocation9], 1
    %608 = vsyncpa [#allocation4], 1

// kernel: tpu_custom_call.1
$region0: #{tpu_custom_call.1}
  #allocation0 [shape = 'u32[]', space=smem, size = 0x4, offset = 0x4, fixed_abs, tag = 'smem constant byte address 0x4 - core index']
  #allocation1 [shape = 'u32[72,128]{1,0:T(1,128)}', space=vmem, size = 0x9000, scoped, tag = 'internal scratch']
  %s0 = inlined_call_operand.hbm [shape: f32[1,128], index: 0, kind: input, shape index: {}]
  %s1 = inlined_call_operand.hbm [shape: bf16[128,128], index: 1, kind: input, shape index: {}]
  %s2 = inlined_call_operand.hbm [shape: bf16[128,128], index: 2, kind: input, shape index: {}]
  %s3 = inlined_call_operand.hbm [shape: f32[128,128], index: 3, kind: input, shape index: {}]
  %s4 = inlined_call_operand.hbm [shape: f32[128,128], index: 4, kind: output, shape index: {}]
  %s5 = sld [smem:[#allocation0]]
  $region42: #{tpu_custom_call.1} parent=0
    _
  %s7 = ssub.s32 1, %s5
  %s8 = scalar_select 0, %s7, %s5
  $region1: #{tpu_custom_call.1} parent=0
    #allocation2 [shape = 'u8[512]{0}', space=vmem, size = 0x400, scoped, tag = 'input window, operand 0, single buffered']
    #allocation3 [shape = 's32[1]{0}', space=sflag, size = 0x4, scoped, tag = 'scoped memory for tpu_custom_call.1']
    #allocation4 [shape = 's32[1]{0}', space=sflag, size = 0x4, scoped, tag = 'scoped memory for tpu_custom_call.1']
    #allocation5 [shape = 'u8[32768]{0}', space=vmem, size = 0x8000, scoped, tag = 'input window, operand 1, single buffered']
    #allocation6 [shape = 's32[1]{0}', space=sflag, size = 0x4, scoped, tag = 'scoped memory for tpu_custom_call.1']
    #allocation7 [shape = 'u8[32768]{0}', space=vmem, size = 0x8000, scoped, tag = 'input window, operand 2, single buffered']
    #allocation8 [shape = 'u8[65536]{0}', space=vmem, size = 0x10000, scoped, tag = 'input window, operand 3, single buffered']
    #allocation9 [shape = 's32[1]{0}', space=sflag, size = 0x4, scoped, tag = 'scoped memory for tpu_custom_call.1']
    #allocation10 [shape = 'u8[65536]{0}', space=vmem, size = 0x10000, scoped, tag = 'output window, operand 0, single buffered']
    %9 = vsyncpa [#allocation3], 0
    %10 = vsyncpa [#allocation6], 0
    %11 = vsyncpa [#allocation9], 0
    %12 = vsyncpa [#allocation4], 0
    // Predicated region
    $region2: #{tpu_custom_call.1} parent=1 // pred_check
      _
    $region3: #{tpu_custom_call.1} parent=1 // pred_check_branch
      %14 = sbr.rel (0) target = $region5
    $region4: #{tpu_custom_call.1} parent=1 // pred_region
      %16 = vsyncadd [#allocation3], 0
      %s18 = sshll.u32 %s0, 4
      %s19 = int_to_ptr.hbm [resolvable:$true] %s18
      %s20 = sshll.u32 [#allocation2], 4
      %s21 = int_to_ptr.vmem [resolvable:$true] %s20
      %23 = dma.hbm_to_vmem [thread:$0]  %s19, 16, %s21, [#allocation3]
    $region5: #{tpu_custom_call.1} parent=1 // pred_fallthru
      _
    // Predicated region
    $region6: #{tpu_custom_call.1} parent=1 // pred_check
      _
    $region7: #{tpu_custom_call.1} parent=1 // pred_check_branch
      %25 = sbr.rel (0) target = $region9
    $region8: #{tpu_custom_call.1} parent=1 // pred_region
      %27 = vsyncadd [#allocation6], 0
      %s28 = sshll.u32 %s1, 4
      %s29 = int_to_ptr.hbm [resolvable:$true] %s28
      %s30 = sshll.u32 [#allocation5], 4
      %s31 = int_to_ptr.vmem [resolvable:$true] %s30
      %36 = dma.hbm_to_vmem [thread:$0]  %s29, 1024, %s31, [#allocation6], 64, 64, 4
    $region9: #{tpu_custom_call.1} parent=1 // pred_fallthru
      _
    // Predicated region
    $region10: #{tpu_custom_call.1} parent=1 // pred_check
      _
    $region11: #{tpu_custom_call.1} parent=1 // pred_check_branch
      %38 = sbr.rel (0) target = $region13
    $region12: #{tpu_custom_call.1} parent=1 // pred_region
      %40 = vsyncadd [#allocation6], 0
      %s41 = sshll.u32 %s2, 4
      %s42 = int_to_ptr.hbm [resolvable:$true] %s41
      %s43 = sshll.u32 [#allocation7], 4
      %s44 = int_to_ptr.vmem [resolvable:$true] %s43
      %49 = dma.hbm_to_vmem [thread:$0]  %s42, 1024, %s44, [#allocation6], 64, 64, 4
    $region13: #{tpu_custom_call.1} parent=1 // pred_fallthru
      _
    // Predicated region
    $region14: #{tpu_custom_call.1} parent=1 // pred_check
      _
    $region15: #{tpu_custom_call.1} parent=1 // pred_check_branch
      %51 = sbr.rel (0) target = $region17
    $region16: #{tpu_custom_call.1} parent=1 // pred_region
      %53 = vsyncadd [#allocation9], 0
      %s54 = sshll.u32 %s3, 4
      %s55 = int_to_ptr.hbm [resolvable:$true] %s54
      %s56 = sshll.u32 [#allocation8], 4
      %s57 = int_to_ptr.vmem [resolvable:$true] %s56
      %62 = dma.hbm_to_vmem [thread:$0]  %s55, 2048, %s57, [#allocation9], 128, 128, 8
    $region17: #{tpu_custom_call.1} parent=1 // pred_fallthru
      _
    // Predicated region
    $region18: #{tpu_custom_call.1} parent=1 // pred_check
      _
    $region19: #{tpu_custom_call.1} parent=1 // pred_check_branch
      %64 = sbr.rel (0) target = $region21
    $region20: #{tpu_custom_call.1} parent=1 // pred_region
      %66 = dma.done [#allocation3], 16
    $region21: #{tpu_custom_call.1} parent=1 // pred_fallthru
      _
    // Predicated region
    $region22: #{tpu_custom_call.1} parent=1 // pred_check
      _
    $region23: #{tpu_custom_call.1} parent=1 // pred_check_branch
      %68 = sbr.rel (0) target = $region25
    $region24: #{tpu_custom_call.1} parent=1 // pred_region
      %70 = dma.done [#allocation6], 1024
    $region25: #{tpu_custom_call.1} parent=1 // pred_fallthru
      _
    // Predicated region
    $region26: #{tpu_custom_call.1} parent=1 // pred_check
      _
    $region27: #{tpu_custom_call.1} parent=1 // pred_check_branch
      %72 = sbr.rel (0) target = $region29
    $region28: #{tpu_custom_call.1} parent=1 // pred_region
      %74 = dma.done [#allocation6], 1024
    $region29: #{tpu_custom_call.1} parent=1 // pred_fallthru
      _
    // Predicated region
    $region30: #{tpu_custom_call.1} parent=1 // pred_check
      _
    $region31: #{tpu_custom_call.1} parent=1 // pred_check_branch
      %76 = sbr.rel (0) target = $region33
    $region32: #{tpu_custom_call.1} parent=1 // pred_region
      %78 = dma.done [#allocation9], 2048
    $region33: #{tpu_custom_call.1} parent=1 // pred_fallthru
      _
    %v79 = vld [vmem:[#allocation2] sm:$0x1]
    %v80 = vld [vmem:[#allocation5] sm:$0xf]
    %v81 = vld [vmem:[#allocation5 + $0x4] sm:$0xf]
    %v82 = vld [vmem:[#allocation5 + $0x8] sm:$0xf]
    %v83 = vld [vmem:[#allocation5 + $0xc] sm:$0xf]
    %v84 = vld [vmem:[#allocation5 + $0x10] sm:$0xf]
    %v85 = vld [vmem:[#allocation5 + $0x14] sm:$0xf]
    %v86 = vld [vmem:[#allocation5 + $0x18] sm:$0xf]
    %v87 = vld [vmem:[#allocation5 + $0x1c] sm:$0xf]
    %v88 = vld [vmem:[#allocation5 + $0x20] sm:$0xf]
    %v89 = vld [vmem:[#allocation5 + $0x24] sm:$0xf]
    %v90 = vld [vmem:[#allocation5 + $0x28] sm:$0xf]
    %v91 = vld [vmem:[#allocation5 + $0x2c] sm:$0xf]
    %v92 = vld [vmem:[#allocation5 + $0x30] sm:$0xf]
    %v93 = vld [vmem:[#allocation5 + $0x34] sm:$0xf]
    %v94 = vld [vmem:[#allocation5 + $0x38] sm:$0xf]
    %v95 = vld [vmem:[#allocation5 + $0x3c] sm:$0xf]
    %v96 = vunpack.c.l.bf16 %v80
    %v97 = vunpack.c.l.bf16 %v81
    %v98 = vunpack.c.l.bf16 %v82
    %v99 = vunpack.c.l.bf16 %v83
    %v100 = vunpack.c.l.bf16 %v84
    %v101 = vunpack.c.l.bf16 %v85
    %v102 = vunpack.c.l.bf16 %v86
    %v103 = vunpack.c.l.bf16 %v87
    %v104 = vunpack.c.l.bf16 %v88
    %v105 = vunpack.c.l.bf16 %v89
    %v106 = vunpack.c.l.bf16 %v90
    %v107 = vunpack.c.l.bf16 %v91
    %v108 = vunpack.c.l.bf16 %v92
    %v109 = vunpack.c.l.bf16 %v93
    %v110 = vunpack.c.l.bf16 %v94
    %v111 = vunpack.c.l.bf16 %v95
    %v113 = vperm.slane %v79, 0
    %v115 = vadd.f32 %v113, %v96
    %v116 = vadd.f32 %v113, %v97
    %v117 = vadd.f32 %v113, %v98
    %v118 = vadd.f32 %v113, %v99
    %v119 = vadd.f32 %v113, %v100
    %v120 = vadd.f32 %v113, %v101
    %v121 = vadd.f32 %v113, %v102
    %v122 = vadd.f32 %v113, %v103
    %v123 = vadd.f32 %v113, %v104
    %v124 = vadd.f32 %v113, %v105
    %v125 = vadd.f32 %v113, %v106
    %v126 = vadd.f32 %v113, %v107
    %v127 = vadd.f32 %v113, %v108
    %v128 = vadd.f32 %v113, %v109
    %v129 = vadd.f32 %v113, %v110
    %v130 = vadd.f32 %v113, %v111
    %v131 = vld [vmem:[#allocation8] sm:$0xff]
    %v132 = vld [vmem:[#allocation8 + $0x8] sm:$0xff]
    %v133 = vld [vmem:[#allocation8 + $0x10] sm:$0xff]
    %v134 = vld [vmem:[#allocation8 + $0x18] sm:$0xff]
    %v135 = vld [vmem:[#allocation8 + $0x20] sm:$0xff]
    %v136 = vld [vmem:[#allocation8 + $0x28] sm:$0xff]
    %v137 = vld [vmem:[#allocation8 + $0x30] sm:$0xff]
    %v138 = vld [vmem:[#allocation8 + $0x38] sm:$0xff]
    %v139 = vld [vmem:[#allocation8 + $0x40] sm:$0xff]
    %v140 = vld [vmem:[#allocation8 + $0x48] sm:$0xff]
    %v141 = vld [vmem:[#allocation8 + $0x50] sm:$0xff]
    %v142 = vld [vmem:[#allocation8 + $0x58] sm:$0xff]
    %v143 = vld [vmem:[#allocation8 + $0x60] sm:$0xff]
    %v144 = vld [vmem:[#allocation8 + $0x68] sm:$0xff]
    %v145 = vld [vmem:[#allocation8 + $0x70] sm:$0xff]
    %v146 = vld [vmem:[#allocation8 + $0x78] sm:$0xff]
    %148 = vset.pattern.permute.xlu0 32
    %149 = vperm.xlu0 %148, %v131
    %v150 = vpop.permute.xlu0 %149
    %153 = vset.pattern.permute.xlu0 32
    %154 = vperm.xlu0 %153, %v132
    %v155 = vpop.permute.xlu0 %154
    %158 = vset.pattern.permute.xlu0 32
    %159 = vperm.xlu0 %158, %v133
    %v160 = vpop.permute.xlu0 %159
    %163 = vset.pattern.permute.xlu0 32
    %164 = vperm.xlu0 %163, %v134
    %v165 = vpop.permute.xlu0 %164
    %168 = vset.pattern.permute.xlu0 32
    %169 = vperm.xlu0 %168, %v135
    %v170 = vpop.permute.xlu0 %169
    %173 = vset.pattern.permute.xlu0 32
    %174 = vperm.xlu0 %173, %v136
    %v175 = vpop.permute.xlu0 %174
    %178 = vset.pattern.permute.xlu0 32
    %179 = vperm.xlu0 %178, %v137
    %v180 = vpop.permute.xlu0 %179
    %183 = vset.pattern.permute.xlu0 32
    %184 = vperm.xlu0 %183, %v138
    %v185 = vpop.permute.xlu0 %184
    %188 = vset.pattern.permute.xlu0 32
    %189 = vperm.xlu0 %188, %v139
    %v190 = vpop.permute.xlu0 %189
    %193 = vset.pattern.permute.xlu0 32
    %194 = vperm.xlu0 %193, %v140
    %v195 = vpop.permute.xlu0 %194
    %198 = vset.pattern.permute.xlu0 32
    %199 = vperm.xlu0 %198, %v141
    %v200 = vpop.permute.xlu0 %199
    %203 = vset.pattern.permute.xlu0 32
    %204 = vperm.xlu0 %203, %v142
    %v205 = vpop.permute.xlu0 %204
    %208 = vset.pattern.permute.xlu0 32
    %209 = vperm.xlu0 %208, %v143
    %v210 = vpop.permute.xlu0 %209
    %213 = vset.pattern.permute.xlu0 32
    %214 = vperm.xlu0 %213, %v144
    %v215 = vpop.permute.xlu0 %214
    %218 = vset.pattern.permute.xlu0 32
    %219 = vperm.xlu0 %218, %v145
    %v220 = vpop.permute.xlu0 %219
    %223 = vset.pattern.permute.xlu0 32
    %224 = vperm.xlu0 %223, %v146
    %v225 = vpop.permute.xlu0 %224
    %v227 = vadd.f32 %v115, %v150
    %v228 = vadd.f32 %v116, %v155
    %v229 = vadd.f32 %v117, %v160
    %v230 = vadd.f32 %v118, %v165
    %v231 = vadd.f32 %v119, %v170
    %v232 = vadd.f32 %v120, %v175
    %v233 = vadd.f32 %v121, %v180
    %v234 = vadd.f32 %v122, %v185
    %v235 = vadd.f32 %v123, %v190
    %v236 = vadd.f32 %v124, %v195
    %v237 = vadd.f32 %v125, %v200
    %v238 = vadd.f32 %v126, %v205
    %v239 = vadd.f32 %v127, %v210
    %v240 = vadd.f32 %v128, %v215
    %v241 = vadd.f32 %v129, %v220
    %v242 = vadd.f32 %v130, %v225
    %v243 = vmul.f32 %v227, 0.01
    %v244 = vmul.f32 %v228, 0.01
    %v245 = vmul.f32 %v229, 0.01
    %v246 = vmul.f32 %v230, 0.01
    %v247 = vmul.f32 %v231, 0.01
    %v248 = vmul.f32 %v232, 0.01
    %v249 = vmul.f32 %v233, 0.01
    %v250 = vmul.f32 %v234, 0.01
    %v251 = vmul.f32 %v235, 0.01
    %v252 = vmul.f32 %v236, 0.01
    %v253 = vmul.f32 %v237, 0.01
    %v254 = vmul.f32 %v238, 0.01
    %v255 = vmul.f32 %v239, 0.01
    %v256 = vmul.f32 %v240, 0.01
    %v257 = vmul.f32 %v241, 0.01
    %v258 = vmul.f32 %v242, 0.01
    %v259 = vmax.f32 %v227, %v243
    %v260 = vmax.f32 %v228, %v244
    %v261 = vmax.f32 %v229, %v245
    %v262 = vmax.f32 %v230, %v246
    %v263 = vmax.f32 %v231, %v247
    %v264 = vmax.f32 %v232, %v248
    %v265 = vmax.f32 %v233, %v249
    %v266 = vmax.f32 %v234, %v250
    %v267 = vmax.f32 %v235, %v251
    %v268 = vmax.f32 %v236, %v252
    %v269 = vmax.f32 %v237, %v253
    %v270 = vmax.f32 %v238, %v254
    %v271 = vmax.f32 %v239, %v255
    %v272 = vmax.f32 %v240, %v256
    %v273 = vmax.f32 %v241, %v257
    %v274 = vmax.f32 %v242, %v258
    %275 = vmax.xlane.f32.xlu0 %v259
    %v276 = vpop.xlane.xlu0 %275
    %277 = vmax.xlane.f32.xlu0 %v260
    %v278 = vpop.xlane.xlu0 %277
    %279 = vmax.xlane.f32.xlu0 %v261
    %v280 = vpop.xlane.xlu0 %279
    %281 = vmax.xlane.f32.xlu0 %v262
    %v282 = vpop.xlane.xlu0 %281
    %283 = vmax.xlane.f32.xlu0 %v263
    %v284 = vpop.xlane.xlu0 %283
    %285 = vmax.xlane.f32.xlu0 %v264
    %v286 = vpop.xlane.xlu0 %285
    %287 = vmax.xlane.f32.xlu0 %v265
    %v288 = vpop.xlane.xlu0 %287
    %289 = vmax.xlane.f32.xlu0 %v266
    %v290 = vpop.xlane.xlu0 %289
    %291 = vmax.xlane.f32.xlu0 %v267
    %v292 = vpop.xlane.xlu0 %291
    %293 = vmax.xlane.f32.xlu0 %v268
    %v294 = vpop.xlane.xlu0 %293
    %295 = vmax.xlane.f32.xlu0 %v269
    %v296 = vpop.xlane.xlu0 %295
    %297 = vmax.xlane.f32.xlu0 %v270
    %v298 = vpop.xlane.xlu0 %297
    %299 = vmax.xlane.f32.xlu0 %v271
    %v300 = vpop.xlane.xlu0 %299
    %301 = vmax.xlane.f32.xlu0 %v272
    %v302 = vpop.xlane.xlu0 %301
    %303 = vmax.xlane.f32.xlu0 %v273
    %v304 = vpop.xlane.xlu0 %303
    %305 = vmax.xlane.f32.xlu0 %v274
    %v306 = vpop.xlane.xlu0 %305
    %v307 = vsub.f32 %v259, %v276
    %v308 = vsub.f32 %v260, %v278
    %v309 = vsub.f32 %v261, %v280
    %v310 = vsub.f32 %v262, %v282
    %v311 = vsub.f32 %v263, %v284
    %v312 = vsub.f32 %v264, %v286
    %v313 = vsub.f32 %v265, %v288
    %v314 = vsub.f32 %v266, %v290
    %v315 = vsub.f32 %v267, %v292
    %v316 = vsub.f32 %v268, %v294
    %v317 = vsub.f32 %v269, %v296
    %v318 = vsub.f32 %v270, %v298
    %v319 = vsub.f32 %v271, %v300
    %v320 = vsub.f32 %v272, %v302
    %v321 = vsub.f32 %v273, %v304
    %v322 = vsub.f32 %v274, %v306
    %v323 = vmul.f32 %v307, 1.442695
    %v324 = vpow.pop %v323
    %v325 = vmul.f32 %v308, 1.442695
    %v326 = vpow.pop %v325
    %v327 = vmul.f32 %v309, 1.442695
    %v328 = vpow.pop %v327
    %v329 = vmul.f32 %v310, 1.442695
    %v330 = vpow.pop %v329
    %v331 = vmul.f32 %v311, 1.442695
    %v332 = vpow.pop %v331
    %v333 = vmul.f32 %v312, 1.442695
    %v334 = vpow.pop %v333
    %v335 = vmul.f32 %v313, 1.442695
    %v336 = vpow.pop %v335
    %v337 = vmul.f32 %v314, 1.442695
    %v338 = vpow.pop %v337
    %v339 = vmul.f32 %v315, 1.442695
    %v340 = vpow.pop %v339
    %v341 = vmul.f32 %v316, 1.442695
    %v342 = vpow.pop %v341
    %v343 = vmul.f32 %v317, 1.442695
    %v344 = vpow.pop %v343
    %v345 = vmul.f32 %v318, 1.442695
    %v346 = vpow.pop %v345
    %v347 = vmul.f32 %v319, 1.442695
    %v348 = vpow.pop %v347
    %v349 = vmul.f32 %v320, 1.442695
    %v350 = vpow.pop %v349
    %v351 = vmul.f32 %v321, 1.442695
    %v352 = vpow.pop %v351
    %v353 = vmul.f32 %v322, 1.442695
    %v354 = vpow.pop %v353
    %355 = vadd.xlane.f32.xlu0 %v324
    %v356 = vpop.xlane.xlu0 %355
    %357 = vadd.xlane.f32.xlu0 %v326
    %v358 = vpop.xlane.xlu0 %357
    %359 = vadd.xlane.f32.xlu0 %v328
    %v360 = vpop.xlane.xlu0 %359
    %361 = vadd.xlane.f32.xlu0 %v330
    %v362 = vpop.xlane.xlu0 %361
    %363 = vadd.xlane.f32.xlu0 %v332
    %v364 = vpop.xlane.xlu0 %363
    %365 = vadd.xlane.f32.xlu0 %v334
    %v366 = vpop.xlane.xlu0 %365
    %367 = vadd.xlane.f32.xlu0 %v336
    %v368 = vpop.xlane.xlu0 %367
    %369 = vadd.xlane.f32.xlu0 %v338
    %v370 = vpop.xlane.xlu0 %369
    %371 = vadd.xlane.f32.xlu0 %v340
    %v372 = vpop.xlane.xlu0 %371
    %373 = vadd.xlane.f32.xlu0 %v342
    %v374 = vpop.xlane.xlu0 %373
    %375 = vadd.xlane.f32.xlu0 %v344
    %v376 = vpop.xlane.xlu0 %375
    %377 = vadd.xlane.f32.xlu0 %v346
    %v378 = vpop.xlane.xlu0 %377
    %379 = vadd.xlane.f32.xlu0 %v348
    %v380 = vpop.xlane.xlu0 %379
    %381 = vadd.xlane.f32.xlu0 %v350
    %v382 = vpop.xlane.xlu0 %381
    %383 = vadd.xlane.f32.xlu0 %v352
    %v384 = vpop.xlane.xlu0 %383
    %385 = vadd.xlane.f32.xlu0 %v354
    %v386 = vpop.xlane.xlu0 %385
    %v387 = vrcp.pop %v356
    %v388 = vrcp.pop %v358
    %v389 = vrcp.pop %v360
    %v390 = vrcp.pop %v362
    %v391 = vrcp.pop %v364
    %v392 = vrcp.pop %v366
    %v393 = vrcp.pop %v368
    %v394 = vrcp.pop %v370
    %v395 = vrcp.pop %v372
    %v396 = vrcp.pop %v374
    %v397 = vrcp.pop %v376
    %v398 = vrcp.pop %v378
    %v399 = vrcp.pop %v380
    %v400 = vrcp.pop %v382
    %v401 = vrcp.pop %v384
    %v402 = vrcp.pop %v386
    %v403 = vmul.f32 %v324, %v387
    %v404 = vmul.f32 %v326, %v388
    %v405 = vmul.f32 %v328, %v389
    %v406 = vmul.f32 %v330, %v390
    %v407 = vmul.f32 %v332, %v391
    %v408 = vmul.f32 %v334, %v392
    %v409 = vmul.f32 %v336, %v393
    %v410 = vmul.f32 %v338, %v394
    %v411 = vmul.f32 %v340, %v395
    %v412 = vmul.f32 %v342, %v396
    %v413 = vmul.f32 %v344, %v397
    %v414 = vmul.f32 %v346, %v398
    %v415 = vmul.f32 %v348, %v399
    %v416 = vmul.f32 %v350, %v400
    %v417 = vmul.f32 %v352, %v401
    %v418 = vmul.f32 %v354, %v402
    %v419 = vpack.c.bf16 %v404, %v403
    %v420 = vpack.c.bf16 %v406, %v405
    %v421 = vpack.c.bf16 %v408, %v407
    %v422 = vpack.c.bf16 %v410, %v409
    %v423 = vpack.c.bf16 %v412, %v411
    %v424 = vpack.c.bf16 %v414, %v413
    %v425 = vpack.c.bf16 %v416, %v415
    %v426 = vpack.c.bf16 %v418, %v417
    %v427 = vld [vmem:[#allocation7] sm:$0xf]
    %v428 = vld [vmem:[#allocation7 + $0x4] sm:$0xf]
    %v429 = vld [vmem:[#allocation7 + $0x8] sm:$0xf]
    %v430 = vld [vmem:[#allocation7 + $0xc] sm:$0xf]
    %v431 = vld [vmem:[#allocation7 + $0x10] sm:$0xf]
    %v432 = vld [vmem:[#allocation7 + $0x14] sm:$0xf]
    %v433 = vld [vmem:[#allocation7 + $0x18] sm:$0xf]
    %v434 = vld [vmem:[#allocation7 + $0x1c] sm:$0xf]
    %v435 = vld [vmem:[#allocation7 + $0x20] sm:$0xf]
    %v436 = vld [vmem:[#allocation7 + $0x24] sm:$0xf]
    %v437 = vld [vmem:[#allocation7 + $0x28] sm:$0xf]
    %v438 = vld [vmem:[#allocation7 + $0x2c] sm:$0xf]
    %v439 = vld [vmem:[#allocation7 + $0x30] sm:$0xf]
    %v440 = vld [vmem:[#allocation7 + $0x34] sm:$0xf]
    %v441 = vld [vmem:[#allocation7 + $0x38] sm:$0xf]
    %v442 = vld [vmem:[#allocation7 + $0x3c] sm:$0xf]
    %v459 = vunpack.c.l.b16 %v427
    %v460 = vunpack.c.l.b16 %v428
    %v461 = vunpack.c.l.b16 %v429
    %v462 = vunpack.c.l.b16 %v430
    %v463 = vunpack.c.l.b16 %v431
    %v464 = vunpack.c.l.b16 %v432
    %v465 = vunpack.c.l.b16 %v433
    %v466 = vunpack.c.l.b16 %v434
    %v467 = vunpack.c.l.b16 %v435
    %v468 = vunpack.c.l.b16 %v436
    %v469 = vunpack.c.l.b16 %v437
    %v470 = vunpack.c.l.b16 %v438
    %v471 = vunpack.c.l.b16 %v439
    %v472 = vunpack.c.l.b16 %v440
    %v473 = vunpack.c.l.b16 %v441
    %v474 = vunpack.c.l.b16 %v442
    %v475 = vpack.c.b16 %v460, %v459
    %v476 = vpack.c.b16 %v462, %v461
    %v477 = vpack.c.b16 %v464, %v463
    %v478 = vpack.c.b16 %v466, %v465
    %v479 = vpack.c.b16 %v468, %v467
    %v480 = vpack.c.b16 %v470, %v469
    %v481 = vpack.c.b16 %v472, %v471
    %v482 = vpack.c.b16 %v474, %v473
    %491 = vmatpush.bf16.msra.mxu0 %v482
    %492 = vmatpush.bf16.msra.mxu0 %v481
    %493 = vmatpush.bf16.msra.mxu0 %v480
    %494 = vmatpush.bf16.msra.mxu0 %v479
    %495 = vmatpush.bf16.msra.mxu0 %v478
    %496 = vmatpush.bf16.msra.mxu0 %v477
    %497 = vmatpush.bf16.msra.mxu0 %v476
    %498 = vmatpush.bf16.msra.mxu0 %v475
    %499 = vmatmul.bf16.gmra.mxu0 %v419
    %v500 = vpop.f32.mrf.mxu0
    %v501 = vadd.f32 0.0, %v500
    %v502 = vpop.f32.mrf.mxu0
    %v503 = vadd.f32 0.0, %v502
    %504 = vmatmul.bf16.gmra.mxu0 %v420
    %v505 = vpop.f32.mrf.mxu0
    %v506 = vadd.f32 0.0, %v505
    %v507 = vpop.f32.mrf.mxu0
    %v508 = vadd.f32 0.0, %v507
    %509 = vmatmul.bf16.gmra.mxu0 %v421
    %v510 = vpop.f32.mrf.mxu0
    %v511 = vadd.f32 0.0, %v510
    %v512 = vpop.f32.mrf.mxu0
    %v513 = vadd.f32 0.0, %v512
    %514 = vmatmul.bf16.gmra.mxu0 %v422
    %v515 = vpop.f32.mrf.mxu0
    %v516 = vadd.f32 0.0, %v515
    %v517 = vpop.f32.mrf.mxu0
    %v518 = vadd.f32 0.0, %v517
    %519 = vmatmul.bf16.gmra.mxu0 %v423
    %v520 = vpop.f32.mrf.mxu0
    %v521 = vadd.f32 0.0, %v520
    %v522 = vpop.f32.mrf.mxu0
    %v523 = vadd.f32 0.0, %v522
    %524 = vmatmul.bf16.gmra.mxu0 %v424
    %v525 = vpop.f32.mrf.mxu0
    %v526 = vadd.f32 0.0, %v525
    %v527 = vpop.f32.mrf.mxu0
    %v528 = vadd.f32 0.0, %v527
    %529 = vmatmul.bf16.gmra.mxu0 %v425
    %v530 = vpop.f32.mrf.mxu0
    %v531 = vadd.f32 0.0, %v530
    %v532 = vpop.f32.mrf.mxu0
    %v533 = vadd.f32 0.0, %v532
    %534 = vmatmul.bf16.gmra.mxu0 %v426
    %v535 = vpop.f32.mrf.mxu0
    %v536 = vadd.f32 0.0, %v535
    %v537 = vpop.f32.mrf.mxu0
    %v538 = vadd.f32 0.0, %v537
    %539 = vdwg.mxu0
    %v540 = vadd.f32 %v131, %v501
    %v541 = vadd.f32 %v132, %v503
    %v542 = vadd.f32 %v133, %v506
    %v543 = vadd.f32 %v134, %v508
    %v544 = vadd.f32 %v135, %v511
    %v545 = vadd.f32 %v136, %v513
    %v546 = vadd.f32 %v137, %v516
    %v547 = vadd.f32 %v138, %v518
    %v548 = vadd.f32 %v139, %v521
    %v549 = vadd.f32 %v140, %v523
    %v550 = vadd.f32 %v141, %v526
    %v551 = vadd.f32 %v142, %v528
    %v552 = vadd.f32 %v143, %v531
    %v553 = vadd.f32 %v144, %v533
    %v554 = vadd.f32 %v145, %v536
    %v555 = vadd.f32 %v146, %v538
    %v556 = vmax.f32 %v540, 0.0
    %v557 = vmax.f32 %v541, 0.0
    %v558 = vmax.f32 %v542, 0.0
    %v559 = vmax.f32 %v543, 0.0
    %v560 = vmax.f32 %v544, 0.0
    %v561 = vmax.f32 %v545, 0.0
    %v562 = vmax.f32 %v546, 0.0
    %v563 = vmax.f32 %v547, 0.0
    %v564 = vmax.f32 %v548, 0.0
    %v565 = vmax.f32 %v549, 0.0
    %v566 = vmax.f32 %v550, 0.0
    %v567 = vmax.f32 %v551, 0.0
    %v568 = vmax.f32 %v552, 0.0
    %v569 = vmax.f32 %v553, 0.0
    %v570 = vmax.f32 %v554, 0.0
    %v571 = vmax.f32 %v555, 0.0
    %572 = vst [vmem:[#allocation10] sm:$0xff] %v556
    %573 = vst [vmem:[#allocation10 + $0x8] sm:$0xff] %v557
    %574 = vst [vmem:[#allocation10 + $0x10] sm:$0xff] %v558
    %575 = vst [vmem:[#allocation10 + $0x18] sm:$0xff] %v559
    %576 = vst [vmem:[#allocation10 + $0x20] sm:$0xff] %v560
    %577 = vst [vmem:[#allocation10 + $0x28] sm:$0xff] %v561
    %578 = vst [vmem:[#allocation10 + $0x30] sm:$0xff] %v562
    %579 = vst [vmem:[#allocation10 + $0x38] sm:$0xff] %v563
    %580 = vst [vmem:[#allocation10 + $0x40] sm:$0xff] %v564
    %581 = vst [vmem:[#allocation10 + $0x48] sm:$0xff] %v565
    %582 = vst [vmem:[#allocation10 + $0x50] sm:$0xff] %v566
    %583 = vst [vmem:[#allocation10 + $0x58] sm:$0xff] %v567
    %584 = vst [vmem:[#allocation10 + $0x60] sm:$0xff] %v568
    %585 = vst [vmem:[#allocation10 + $0x68] sm:$0xff] %v569
    %586 = vst [vmem:[#allocation10 + $0x70] sm:$0xff] %v570
    %587 = vst [vmem:[#allocation10 + $0x78] sm:$0xff] %v571
    // Predicated region
    $region34: #{tpu_custom_call.1} parent=1 // pred_check
      _
    $region35: #{tpu_custom_call.1} parent=1 // pred_check_branch
      %589 = sbr.rel (0) target = $region37
    $region36: #{tpu_custom_call.1} parent=1 // pred_region
      %591 = vsyncadd [#allocation4], 0
      %s592 = sshll.u32 [#allocation10], 4
      %s593 = int_to_ptr.vmem [resolvable:$true] %s592
      %s594 = sshll.u32 %s4, 4
      %s595 = int_to_ptr.hbm [resolvable:$true] %s594
      %600 = dma.vmem_to_hbm [thread:$0]  %s593, 2048, %s595, [#allocation4], 128, 128, 8
    $region37: #{tpu_custom_call.1} parent=1 // pred_fallthru
      _
    // Predicated region
    $region38: #{tpu_custom_call.1} parent=1 // pred_check
      _
    $region39: #{tpu_custom_call.1} parent=1 // pred_check_branch
      %602 = sbr.rel (0) target = $region41
    $region40: #{tpu_custom_call.1} parent=1 // pred_region
      %604 = dma.done [#allocation4], 2048
    $region41: #{tpu_custom_call.1} parent=1 // pred_fallthru
      _
    %605 = vsyncpa [#allocation3], 1
    %606 = vsyncpa [#allocation6], 1
    %607 = vsyncpa [#allocation9], 1
    %608 = vsyncpa [#allocation4], 1

</llo_original>
